<compile_context>
chip_gen: v7x
topology: tpu7x:2x2x1
jax: 0.10.0
libtpu: 0.0.40
codegen_flags: <defaults>
</compile_context>

<pallas_src>
import functools

import jax
import jax.numpy as jnp
from jax import lax
from jax.experimental import pallas as pl
from jax.experimental.pallas import tpu as pltpu


def _conv_proj_kernel(xs_ref, wdw_ref, wlin_ref, bias_ref, o_ref, *, tH, W, K, mxu_dtype):
    # xs_ref:   (1, 1, tH+K-1, W+K-1, C)  one padded row strip (NHWC, halo included)
    # wdw_ref:  (K*K, C)                  depthwise taps, BN scale already folded in
    # wlin_ref: (C, C_out_pad)            linear weight (transposed, lane-padded, mxu dtype)
    # bias_ref: (1, C_out_pad)            BN shift pushed through the linear layer (f32)
    # o_ref:    (1, tH*W, C_out_pad)
    C = xs_ref.shape[-1]

    # Depthwise conv: 9 per-tap Ref loads (static offsets) * per-channel tap,
    # accumulated in f32 on the VPU. No whole-image value is ever materialized.
    acc = jnp.zeros((tH, W, C), dtype=jnp.float32)
    for ki in range(K):
        for kj in range(K):
            tap = wdw_ref[ki * K + kj, :]                       # (C,)
            win = xs_ref[0, 0, ki:ki + tH, kj:kj + W, :]        # (tH, W, C) ref load
            acc = acc + win.astype(jnp.float32) * tap

    # 'b c h w -> b (h w) c' for this strip, then Linear on the MXU.
    y = acc.reshape(tH * W, C).astype(mxu_dtype)
    out = jnp.dot(y, wlin_ref[...], preferred_element_type=jnp.float32) + bias_ref[...]
    o_ref[0] = out.astype(o_ref.dtype)


def conv_projection(x_nchw, w_dw, bn_gamma, bn_beta, bn_mean, bn_var, w_lin, *,
                    kernel_size=3, padding=1, eps=1e-5, row_tile=8,
                    mxu_dtype=jnp.bfloat16):
    """x_nchw: (B, C_in, H, W). Returns (B, H*W, C_out) — matches the PyTorch module."""
    B, C, H, W = x_nchw.shape
    K = kernel_size
    if 2 * padding != K - 1:
        # Kernel assumes 'same' geometry (stride=1); fail loudly instead of silently.
        raise NotImplementedError("conv_projection kernel supports stride=1, padding=(k-1)//2")
    C_out = w_lin.shape[0]
    LANES = 128
    C_out_pad = ((C_out + LANES - 1) // LANES) * LANES

    # Row-strip tiling (falls back to whole image if H is not divisible).
    tH = row_tile if (H % row_tile == 0) else H
    S = H // tH
    Hp, Wp = H + 2 * padding, W + 2 * padding

    # ---- parameter folding (tiny, once per call) ----
    scale = bn_gamma / jnp.sqrt(bn_var + eps)                               # (C,)
    shift = bn_beta - bn_mean * scale                                       # (C,)
    # PyTorch depthwise weight (C,1,K,K) -> (K*K, C); fold BN scale into the taps.
    wdw_taps = jnp.transpose(w_dw[:, 0, :, :], (1, 2, 0)).reshape(K * K, C) * scale[None, :]
    w_lin_t = jnp.transpose(w_lin).astype(jnp.float32)                      # (C, C_out)
    bias = shift @ w_lin_t                                                  # (C_out,)
    w_lin_p = jnp.pad(w_lin_t, ((0, 0), (0, C_out_pad - C_out))).astype(mxu_dtype)
    bias_p = jnp.pad(bias, (0, C_out_pad - C_out)).reshape(1, C_out_pad).astype(jnp.float32)

    # ---- layout glue: NCHW -> NHWC, 'same' zero pad, overlapping row strips ----
    # (transpose + pad + gather fuse into a single XLA pass producing x_strips)
    x_nhwc = jnp.transpose(x_nchw, (0, 2, 3, 1))
    x_pad = jnp.pad(x_nhwc, ((0, 0), (padding, padding), (padding, padding), (0, 0)))
    row_idx = (jnp.arange(S) * tH)[:, None] + jnp.arange(tH + K - 1)[None, :]   # (S, tH+K-1)
    x_strips = x_pad[:, row_idx]                                            # (B, S, tH+K-1, Wp, C)

    kernel = functools.partial(_conv_proj_kernel, tH=tH, W=W, K=K, mxu_dtype=mxu_dtype)
    out = pl.pallas_call(
        kernel,
        out_shape=jax.ShapeDtypeStruct((B, H * W, C_out_pad), x_nchw.dtype),
        grid_spec=pltpu.PrefetchScalarGridSpec(
            num_scalar_prefetch=0,
            grid=(B, S),
            in_specs=[
                pl.BlockSpec((1, 1, tH + K - 1, Wp, C), lambda b, s: (b, s, 0, 0, 0)),
                pl.BlockSpec((K * K, C), lambda b, s: (0, 0)),
                pl.BlockSpec((C, C_out_pad), lambda b, s: (0, 0)),
                pl.BlockSpec((1, C_out_pad), lambda b, s: (0, 0)),
            ],
            out_specs=pl.BlockSpec((1, tH * W, C_out_pad), lambda b, s: (b, s, 0)),
        ),
        compiler_params=pltpu.CompilerParams(
            dimension_semantics=("parallel", "parallel"),
            vmem_limit_bytes=32 * 1024 * 1024,
        ),
    )(x_strips, wdw_taps, w_lin_p, bias_p)

    return out[:, :, :C_out] if C_out_pad != C_out else out


def _reference(x_nchw, w_dw, bn_gamma, bn_beta, bn_mean, bn_var, w_lin, *,
               padding=1, eps=1e-5):
    """Pure-JAX reference mirroring the PyTorch module (inference-mode BN)."""
    B, C, H, W = x_nchw.shape
    y = lax.conv_general_dilated(
        x_nchw, w_dw, window_strides=(1, 1),
        padding=((padding, padding), (padding, padding)),
        dimension_numbers=("NCHW", "OIHW", "NCHW"),
        feature_group_count=C,
    )
    scale = bn_gamma / jnp.sqrt(bn_var + eps)
    y = (y - bn_mean[None, :, None, None]) * scale[None, :, None, None] \
        + bn_beta[None, :, None, None]
    y = jnp.transpose(y, (0, 2, 3, 1)).reshape(B, H * W, C)                 # b (h w) c
    return jnp.einsum("bsc,oc->bso", y, w_lin)


if __name__ == "__main__":
    key = jax.random.PRNGKey(0)
    k1, k2, k3, k4, k5, k6 = jax.random.split(key, 6)

    B, C_in, H, W = 2, 4, 16, 16
    C_out, K = 8, 3

    x = jax.random.normal(k1, (B, C_in, H, W), dtype=jnp.float32)
    w_dw = jax.random.normal(k2, (C_in, 1, K, K), dtype=jnp.float32) * 0.3
    bn_gamma = 1.0 + 0.1 * jax.random.normal(k3, (C_in,), dtype=jnp.float32)
    bn_beta = 0.1 * jax.random.normal(k4, (C_in,), dtype=jnp.float32)
    bn_mean = 0.05 * jax.random.normal(k5, (C_in,), dtype=jnp.float32)
    bn_var = jnp.abs(1.0 + 0.1 * jax.random.normal(k6, (C_in,), dtype=jnp.float32))
    w_lin = jax.random.normal(jax.random.PRNGKey(42), (C_out, C_in), dtype=jnp.float32) * 0.2

    ref = _reference(x, w_dw, bn_gamma, bn_beta, bn_mean, bn_var, w_lin, padding=1)

    # Default path: bf16 MXU inputs, f32 accumulation (v6e/v7x fast path).
    out = conv_projection(x, w_dw, bn_gamma, bn_beta, bn_mean, bn_var, w_lin,
                          kernel_size=K, padding=1)
    out = jax.block_until_ready(out)
    assert out.shape == (B, H * W, C_out), out.shape
    assert jnp.allclose(out, ref, atol=5e-2, rtol=5e-2), \
        float(jnp.max(jnp.abs(out - ref)))

    # Full-precision MXU path: tight check against the f32 reference.
    out_f32 = conv_projection(x, w_dw, bn_gamma, bn_beta, bn_mean, bn_var, w_lin,
                              kernel_size=K, padding=1, mxu_dtype=jnp.float32)
    out_f32 = jax.block_until_ready(out_f32)
    assert jnp.allclose(out_f32, ref, atol=1e-4, rtol=1e-4), \
        float(jnp.max(jnp.abs(out_f32 - ref)))

    # TODO(synk): BatchNorm is inference-mode only (running stats folded into the
    # conv taps + post-matmul bias); PyTorch training-mode batch statistics are a
    # wrapper-side reduction and are not reproduced here.
    # TODO(synk): only the default method='conv' branch of ConvProjection is
    # implemented; 'avg' and 'linear' branches are not translated.
    print("KERNEL_OK")
</pallas_src>

<mosaic_0001>
module attributes {stable_mosaic.version = 11 : i64} {
  func.func @_conv_proj_kernel(%arg0: i32, %arg1: i32, %arg2: memref<1x1x10x18x4xf32, #tpu.memory_space<vmem>>, %arg3: memref<9x4xf32, #tpu.memory_space<vmem>>, %arg4: memref<4x128xbf16, #tpu.memory_space<vmem>>, %arg5: memref<1x128xf32, #tpu.memory_space<vmem>>, %arg6: memref<1x128x128xf32, #tpu.memory_space<vmem>>) attributes {dimension_semantics = [#tpu.dimension_semantics<parallel>, #tpu.dimension_semantics<parallel>], iteration_bounds = array<i64: 2, 2>, scalar_prefetch = 0 : i64, scratch_operands = 0 : i64, tpu.core_type = #tpu.core_type<tc>, window_params = [{transform_indices = @transform_0, window_bounds = array<i64: 1, 1, 10, 18, 4>}, {pipeline_mode = #tpu.pipeline_mode<synchronous>, transform_indices = @transform_1, window_bounds = array<i64: 9, 4>}, {pipeline_mode = #tpu.pipeline_mode<synchronous>, transform_indices = @transform_2, window_bounds = array<i64: 4, 128>}, {pipeline_mode = #tpu.pipeline_mode<synchronous>, transform_indices = @transform_3, window_bounds = array<i64: 1, 128>}, {transform_indices = @transform_4, window_bounds = array<i64: 1, 128, 128>}]} {
    %cst = arith.constant 0.000000e+00 : f32
    %0 = vector.broadcast %cst : f32 to vector<8x16x4xf32>
    %c0 = arith.constant 0 : index
    %c0_0 = arith.constant 0 : index
    %1 = vector.load %arg3[%c0, %c0_0] : memref<9x4xf32, #tpu.memory_space<vmem>>, vector<1x4xf32>
    %2 = vector.shape_cast %1 : vector<1x4xf32> to vector<4xf32>
    %c0_1 = arith.constant 0 : index
    %c0_2 = arith.constant 0 : index
    %c0_3 = arith.constant 0 : index
    %c0_4 = arith.constant 0 : index
    %c0_5 = arith.constant 0 : index
    %3 = vector.load %arg2[%c0_1, %c0_2, %c0_3, %c0_4, %c0_5] : memref<1x1x10x18x4xf32, #tpu.memory_space<vmem>>, vector<1x1x8x16x4xf32>
    %4 = vector.shape_cast %3 : vector<1x1x8x16x4xf32> to vector<8x16x4xf32>
    %5 = vector.shape_cast %2 : vector<4xf32> to vector<1x1x4xf32>
    %6 = vector.broadcast %5 : vector<1x1x4xf32> to vector<8x16x4xf32>
    %7 = arith.mulf %4, %6 : vector<8x16x4xf32>
    %8 = arith.addf %0, %7 : vector<8x16x4xf32>
    %c1 = arith.constant 1 : index
    %c0_6 = arith.constant 0 : index
    %9 = vector.load %arg3[%c1, %c0_6] : memref<9x4xf32, #tpu.memory_space<vmem>>, vector<1x4xf32>
    %10 = vector.shape_cast %9 : vector<1x4xf32> to vector<4xf32>
    %c0_7 = arith.constant 0 : index
    %c0_8 = arith.constant 0 : index
    %c0_9 = arith.constant 0 : index
    %c1_10 = arith.constant 1 : index
    %c0_11 = arith.constant 0 : index
    %11 = vector.load %arg2[%c0_7, %c0_8, %c0_9, %c1_10, %c0_11] : memref<1x1x10x18x4xf32, #tpu.memory_space<vmem>>, vector<1x1x8x16x4xf32>
    %12 = vector.shape_cast %11 : vector<1x1x8x16x4xf32> to vector<8x16x4xf32>
    %13 = vector.shape_cast %10 : vector<4xf32> to vector<1x1x4xf32>
    %14 = vector.broadcast %13 : vector<1x1x4xf32> to vector<8x16x4xf32>
    %15 = arith.mulf %12, %14 : vector<8x16x4xf32>
    %16 = arith.addf %8, %15 : vector<8x16x4xf32>
    %c2 = arith.constant 2 : index
    %c0_12 = arith.constant 0 : index
    %17 = vector.load %arg3[%c2, %c0_12] : memref<9x4xf32, #tpu.memory_space<vmem>>, vector<1x4xf32>
    %18 = vector.shape_cast %17 : vector<1x4xf32> to vector<4xf32>
    %c0_13 = arith.constant 0 : index
    %c0_14 = arith.constant 0 : index
    %c0_15 = arith.constant 0 : index
    %c2_16 = arith.constant 2 : index
    %c0_17 = arith.constant 0 : index
    %19 = vector.load %arg2[%c0_13, %c0_14, %c0_15, %c2_16, %c0_17] : memref<1x1x10x18x4xf32, #tpu.memory_space<vmem>>, vector<1x1x8x16x4xf32>
    %20 = vector.shape_cast %19 : vector<1x1x8x16x4xf32> to vector<8x16x4xf32>
    %21 = vector.shape_cast %18 : vector<4xf32> to vector<1x1x4xf32>
    %22 = vector.broadcast %21 : vector<1x1x4xf32> to vector<8x16x4xf32>
    %23 = arith.mulf %20, %22 : vector<8x16x4xf32>
    %24 = arith.addf %16, %23 : vector<8x16x4xf32>
    %c3 = arith.constant 3 : index
    %c0_18 = arith.constant 0 : index
    %25 = vector.load %arg3[%c3, %c0_18] : memref<9x4xf32, #tpu.memory_space<vmem>>, vector<1x4xf32>
    %26 = vector.shape_cast %25 : vector<1x4xf32> to vector<4xf32>
    %c0_19 = arith.constant 0 : index
    %c0_20 = arith.constant 0 : index
    %c1_21 = arith.constant 1 : index
    %c0_22 = arith.constant 0 : index
    %c0_23 = arith.constant 0 : index
    %27 = vector.load %arg2[%c0_19, %c0_20, %c1_21, %c0_22, %c0_23] : memref<1x1x10x18x4xf32, #tpu.memory_space<vmem>>, vector<1x1x8x16x4xf32>
    %28 = vector.shape_cast %27 : vector<1x1x8x16x4xf32> to vector<8x16x4xf32>
    %29 = vector.shape_cast %26 : vector<4xf32> to vector<1x1x4xf32>
    %30 = vector.broadcast %29 : vector<1x1x4xf32> to vector<8x16x4xf32>
    %31 = arith.mulf %28, %30 : vector<8x16x4xf32>
    %32 = arith.addf %24, %31 : vector<8x16x4xf32>
    %c4 = arith.constant 4 : index
    %c0_24 = arith.constant 0 : index
    %33 = vector.load %arg3[%c4, %c0_24] : memref<9x4xf32, #tpu.memory_space<vmem>>, vector<1x4xf32>
    %34 = vector.shape_cast %33 : vector<1x4xf32> to vector<4xf32>
    %c0_25 = arith.constant 0 : index
    %c0_26 = arith.constant 0 : index
    %c1_27 = arith.constant 1 : index
    %c1_28 = arith.constant 1 : index
    %c0_29 = arith.constant 0 : index
    %35 = vector.load %arg2[%c0_25, %c0_26, %c1_27, %c1_28, %c0_29] : memref<1x1x10x18x4xf32, #tpu.memory_space<vmem>>, vector<1x1x8x16x4xf32>
    %36 = vector.shape_cast %35 : vector<1x1x8x16x4xf32> to vector<8x16x4xf32>
    %37 = vector.shape_cast %34 : vector<4xf32> to vector<1x1x4xf32>
    %38 = vector.broadcast %37 : vector<1x1x4xf32> to vector<8x16x4xf32>
    %39 = arith.mulf %36, %38 : vector<8x16x4xf32>
    %40 = arith.addf %32, %39 : vector<8x16x4xf32>
    %c5 = arith.constant 5 : index
    %c0_30 = arith.constant 0 : index
    %41 = vector.load %arg3[%c5, %c0_30] : memref<9x4xf32, #tpu.memory_space<vmem>>, vector<1x4xf32>
    %42 = vector.shape_cast %41 : vector<1x4xf32> to vector<4xf32>
    %c0_31 = arith.constant 0 : index
    %c0_32 = arith.constant 0 : index
    %c1_33 = arith.constant 1 : index
    %c2_34 = arith.constant 2 : index
    %c0_35 = arith.constant 0 : index
    %43 = vector.load %arg2[%c0_31, %c0_32, %c1_33, %c2_34, %c0_35] : memref<1x1x10x18x4xf32, #tpu.memory_space<vmem>>, vector<1x1x8x16x4xf32>
    %44 = vector.shape_cast %43 : vector<1x1x8x16x4xf32> to vector<8x16x4xf32>
    %45 = vector.shape_cast %42 : vector<4xf32> to vector<1x1x4xf32>
    %46 = vector.broadcast %45 : vector<1x1x4xf32> to vector<8x16x4xf32>
    %47 = arith.mulf %44, %46 : vector<8x16x4xf32>
    %48 = arith.addf %40, %47 : vector<8x16x4xf32>
    %c6 = arith.constant 6 : index
    %c0_36 = arith.constant 0 : index
    %49 = vector.load %arg3[%c6, %c0_36] : memref<9x4xf32, #tpu.memory_space<vmem>>, vector<1x4xf32>
    %50 = vector.shape_cast %49 : vector<1x4xf32> to vector<4xf32>
    %c0_37 = arith.constant 0 : index
    %c0_38 = arith.constant 0 : index
    %c2_39 = arith.constant 2 : index
    %c0_40 = arith.constant 0 : index
    %c0_41 = arith.constant 0 : index
    %51 = vector.load %arg2[%c0_37, %c0_38, %c2_39, %c0_40, %c0_41] : memref<1x1x10x18x4xf32, #tpu.memory_space<vmem>>, vector<1x1x8x16x4xf32>
    %52 = vector.shape_cast %51 : vector<1x1x8x16x4xf32> to vector<8x16x4xf32>
    %53 = vector.shape_cast %50 : vector<4xf32> to vector<1x1x4xf32>
    %54 = vector.broadcast %53 : vector<1x1x4xf32> to vector<8x16x4xf32>
    %55 = arith.mulf %52, %54 : vector<8x16x4xf32>
    %56 = arith.addf %48, %55 : vector<8x16x4xf32>
    %c7 = arith.constant 7 : index
    %c0_42 = arith.constant 0 : index
    %57 = vector.load %arg3[%c7, %c0_42] : memref<9x4xf32, #tpu.memory_space<vmem>>, vector<1x4xf32>
    %58 = vector.shape_cast %57 : vector<1x4xf32> to vector<4xf32>
    %c0_43 = arith.constant 0 : index
    %c0_44 = arith.constant 0 : index
    %c2_45 = arith.constant 2 : index
    %c1_46 = arith.constant 1 : index
    %c0_47 = arith.constant 0 : index
    %59 = vector.load %arg2[%c0_43, %c0_44, %c2_45, %c1_46, %c0_47] : memref<1x1x10x18x4xf32, #tpu.memory_space<vmem>>, vector<1x1x8x16x4xf32>
    %60 = vector.shape_cast %59 : vector<1x1x8x16x4xf32> to vector<8x16x4xf32>
    %61 = vector.shape_cast %58 : vector<4xf32> to vector<1x1x4xf32>
    %62 = vector.broadcast %61 : vector<1x1x4xf32> to vector<8x16x4xf32>
    %63 = arith.mulf %60, %62 : vector<8x16x4xf32>
    %64 = arith.addf %56, %63 : vector<8x16x4xf32>
    %c8 = arith.constant 8 : index
    %c0_48 = arith.constant 0 : index
    %65 = vector.load %arg3[%c8, %c0_48] : memref<9x4xf32, #tpu.memory_space<vmem>>, vector<1x4xf32>
    %66 = vector.shape_cast %65 : vector<1x4xf32> to vector<4xf32>
    %c0_49 = arith.constant 0 : index
    %c0_50 = arith.constant 0 : index
    %c2_51 = arith.constant 2 : index
    %c2_52 = arith.constant 2 : index
    %c0_53 = arith.constant 0 : index
    %67 = vector.load %arg2[%c0_49, %c0_50, %c2_51, %c2_52, %c0_53] : memref<1x1x10x18x4xf32, #tpu.memory_space<vmem>>, vector<1x1x8x16x4xf32>
    %68 = vector.shape_cast %67 : vector<1x1x8x16x4xf32> to vector<8x16x4xf32>
    %69 = vector.shape_cast %66 : vector<4xf32> to vector<1x1x4xf32>
    %70 = vector.broadcast %69 : vector<1x1x4xf32> to vector<8x16x4xf32>
    %71 = arith.mulf %68, %70 : vector<8x16x4xf32>
    %72 = arith.addf %64, %71 : vector<8x16x4xf32>
    %73 = vector.shape_cast %72 : vector<8x16x4xf32> to vector<128x4xf32>
    %74 = arith.truncf %73 : vector<128x4xf32> to vector<128x4xbf16>
    %c0_54 = arith.constant 0 : index
    %c0_55 = arith.constant 0 : index
    %75 = vector.load %arg4[%c0_54, %c0_55] : memref<4x128xbf16, #tpu.memory_space<vmem>>, vector<4x128xbf16>
    %cst_56 = arith.constant dense<0.000000e+00> : vector<128x128xf32>
    %76 = tpu.matmul %74, %75, %cst_56 {dimension_numbers = #tpu.dot_dimension_numbers<[1], [0], [0], [1], [0, 0, 1, 1], [], []>} : vector<128x4xbf16>, vector<4x128xbf16>, vector<128x128xf32> -> vector<128x128xf32>
    %c0_57 = arith.constant 0 : index
    %c0_58 = arith.constant 0 : index
    %77 = vector.load %arg5[%c0_57, %c0_58] : memref<1x128xf32, #tpu.memory_space<vmem>>, vector<1x128xf32>
    %78 = vector.broadcast %77 : vector<1x128xf32> to vector<128x128xf32>
    %79 = arith.addf %76, %78 : vector<128x128xf32>
    %c0_59 = arith.constant 0 : index
    %c0_60 = arith.constant 0 : index
    %c0_61 = arith.constant 0 : index
    %80 = vector.load %arg6[%c0_59, %c0_60, %c0_61] : memref<1x128x128xf32, #tpu.memory_space<vmem>>, vector<1x128x128xf32>
    %81 = vector.shape_cast %80 : vector<1x128x128xf32> to vector<128x128xf32>
    %82 = vector.shape_cast %79 : vector<128x128xf32> to vector<1x128x128xf32>
    tpu.vector_store %arg6[%c0_59, %c0_60, %c0_61], %82 {strides = array<i32>} : memref<1x128x128xf32, #tpu.memory_space<vmem>>, vector<1x128x128xf32>,
    return
  }
  func.func @transform_0(%arg0: i32, %arg1: i32) -> (i32, i32, i32, i32, i32) {
    %c0_i32 = arith.constant 0 : i32
    %c0_i32_0 = arith.constant 0 : i32
    %c0_i32_1 = arith.constant 0 : i32
    %c0_i32_2 = arith.constant 0 : i32
    return %arg0, %arg1, %c0_i32, %c0_i32_0, %c0_i32_1 : i32, i32, i32, i32, i32
  }
  func.func @transform_1(%arg0: i32, %arg1: i32) -> (i32, i32) {
    %c0_i32 = arith.constant 0 : i32
    %c0_i32_0 = arith.constant 0 : i32
    %c0_i32_1 = arith.constant 0 : i32
    return %c0_i32, %c0_i32_0 : i32, i32
  }
  func.func @transform_2(%arg0: i32, %arg1: i32) -> (i32, i32) {
    %c0_i32 = arith.constant 0 : i32
    %c0_i32_0 = arith.constant 0 : i32
    %c0_i32_1 = arith.constant 0 : i32
    return %c0_i32, %c0_i32_0 : i32, i32
  }
  func.func @transform_3(%arg0: i32, %arg1: i32) -> (i32, i32) {
    %c0_i32 = arith.constant 0 : i32
    %c0_i32_0 = arith.constant 0 : i32
    %c0_i32_1 = arith.constant 0 : i32
    return %c0_i32, %c0_i32_0 : i32, i32
  }
  func.func @transform_4(%arg0: i32, %arg1: i32) -> (i32, i32, i32) {
    %c0_i32 = arith.constant 0 : i32
    %c0_i32_0 = arith.constant 0 : i32
    return %arg0, %arg1, %c0_i32 : i32, i32, i32
  }
}

</mosaic_0001>

<llo_original>
// kernel: tpu_custom_call.1
$region0: #{tpu_custom_call.1}
  #allocation0 [shape = 'u32[]', space=smem, size = 0x4, offset = 0x4, fixed_abs, tag = 'smem constant byte address 0x4 - core index']
  #allocation1 [shape = 'u32[144,128]{1,0:T(1,128)}', space=vmem, size = 0x12000, scoped, tag = 'internal scratch']
  %s0 = inlined_call_operand.vmem [shape: f32[2,2,10,18,4], index: 0, kind: input, shape index: {}]
  %s1 = inlined_call_operand.vmem [shape: f32[9,4], index: 1, kind: input, shape index: {}]
  %s2 = inlined_call_operand.vmem [shape: bf16[4,128], index: 2, kind: input, shape index: {}]
  %s3 = inlined_call_operand.vmem [shape: f32[1,128], index: 3, kind: input, shape index: {}]
  %s4 = inlined_call_operand.hbm [shape: f32[2,256,128], index: 4, kind: output, shape index: {}]
  %s5 = sld [smem:[#allocation0]]
  $region49: #{tpu_custom_call.1} parent=0
    _
  %s7 = ssub.s32 1, %s5
  %s8 = scalar_select 0, %s7, %s5
  $region1: #{tpu_custom_call.1} parent=0
    #allocation2 [shape = 'u8[131072]{0}', space=vmem, size = 0x20000, scoped, tag = 'output window, operand 0']
    #allocation3 [shape = 's32[2]{0}', space=sflag, size = 0x8, scoped, tag = 'scoped memory for tpu_custom_call.1']
    %9 = vsyncpa [#allocation3], 0
    %s10 = scalar_lea.sflag [#allocation3], 1
    %11 = vsyncpa %s10, 0
    loop: start=0, step=1, limit=6
    $region2: #{tpu_custom_call.1} parent=1 // loop_pre_header
      _
    $region3: #{tpu_custom_call.1} parent=1 // loop_header
      %s13 = sphi 0, %s17
      %p14 = scmp.ge.s32.totalorder %s13, 6
      %s20 = sphi 0, %s32
      %s21 = sphi 0, %s28
      %s22 = sphi 0, %s20
      %s23 = sphi 0, %s21
      %s24 = sphi 0, %s22
      %s25 = sphi 0, %s23
      %s37 = sphi 0, %s39
      %s40 = sphi 0, %s37
      %s41 = sphi 0, %s40
      %s57 = sphi 0, %s41
      %s61 = sphi 0, %s61
      %s63 = sphi 0, %s61
      %s64 = sphi 0, %s63
      %s78 = sphi 0, %s64
      %s82 = sphi 0, %s82
      %s84 = sphi 0, %s82
      %s85 = sphi 0, %s84
      %s99 = sphi 0, %s85
      %s103 = sphi 0, %s103
      %s105 = sphi 0, %s103
      %s106 = sphi 0, %s105
      %s120 = sphi 0, %s106
      %s128 = sphi 0, %s130
      %s131 = sphi 0, %s128
      %s132 = sphi 0, %s131
      %s148 = sphi 0, %s132
    $region4: #{tpu_custom_call.1} parent=1 // loop_header_branch
      %16 = sbr.rel (%p14) target = $region8
    $region5: #{tpu_custom_call.1} parent=1 // loop_body
      %s18 = ssub.s32 %s13, 1
      %s19 = ssub.s32 %s13, 2
      %s26 = sadd.s32 1, %s21
      %p27 = scmp.ge.s32.totalorder %s26, 2
      %s28 = scalar_select %p27, 0, %s26
      %s29 = sadd.s32 1, %s20
      %s30 = scalar_select %p27, %s29, %s20
      %p31 = scmp.ge.s32.totalorder %s30, 2
      %s32 = scalar_select %p31, 0, %s30
      %s33 = ssub.s32 %s20, %s32
      %s34 = ssub.s32 %s21, %s28
      %s35 = sor.u32 %s33, %s34
      %p36 = scmp.eq.s32.totalorder %s35, 0
      %s38 = sadd.s32 %s37, 1
      %s39 = scalar_select %p36, %s37, %s38
      %p42 = pneg %p36
      %p43 = scmp.eq.s32.totalorder %s13, 3
      %p44 = por %p42, %p43
      %p45 = scmp.ne.s32.totalorder %s37, %s40
      %p46 = scmp.eq.s32.totalorder %s13, 0
      %p47 = por %p45, %p46
      %p48 = scmp.ne.s32.totalorder %s37, %s40
      %p49 = scmp.eq.s32.totalorder %s18, 3
      %p50 = por %p48, %p49
      %p51 = scmp.ne.s32.totalorder %s40, %s41
      %p52 = scmp.eq.s32.totalorder %s18, 0
      %p53 = por %p51, %p52
      %p54 = scmp.ne.s32.totalorder %s40, %s41
      %p55 = scmp.eq.s32.totalorder %s19, 3
      %p56 = por %p54, %p55
      %p58 = scmp.ne.s32.totalorder %s41, %s57
      %p59 = scmp.eq.s32.totalorder %s19, 0
      %p60 = por %p58, %p59
      %s62 = sadd.s32 %s61, 1
      %p65 = scmp.eq.s32.totalorder %s13, 3
      %p66 = scmp.ne.s32.totalorder %s61, %s63
      %p67 = scmp.eq.s32.totalorder %s13, 0
      %p68 = por %p66, %p67
      %p69 = scmp.ne.s32.totalorder %s61, %s63
      %p70 = scmp.eq.s32.totalorder %s18, 3
      %p71 = por %p69, %p70
      %p72 = scmp.ne.s32.totalorder %s63, %s64
      %p73 = scmp.eq.s32.totalorder %s18, 0
      %p74 = por %p72, %p73
      %p75 = scmp.ne.s32.totalorder %s63, %s64
      %p76 = scmp.eq.s32.totalorder %s19, 3
      %p77 = por %p75, %p76
      %p79 = scmp.ne.s32.totalorder %s64, %s78
      %p80 = scmp.eq.s32.totalorder %s19, 0
      %p81 = por %p79, %p80
      %s83 = sadd.s32 %s82, 1
      %p86 = scmp.eq.s32.totalorder %s13, 3
      %p87 = scmp.ne.s32.totalorder %s82, %s84
      %p88 = scmp.eq.s32.totalorder %s13, 0
      %p89 = por %p87, %p88
      %p90 = scmp.ne.s32.totalorder %s82, %s84
      %p91 = scmp.eq.s32.totalorder %s18, 3
      %p92 = por %p90, %p91
      %p93 = scmp.ne.s32.totalorder %s84, %s85
      %p94 = scmp.eq.s32.totalorder %s18, 0
      %p95 = por %p93, %p94
      %p96 = scmp.ne.s32.totalorder %s84, %s85
      %p97 = scmp.eq.s32.totalorder %s19, 3
      %p98 = por %p96, %p97
      %p100 = scmp.ne.s32.totalorder %s85, %s99
      %p101 = scmp.eq.s32.totalorder %s19, 0
      %p102 = por %p100, %p101
      %s104 = sadd.s32 %s103, 1
      %p107 = scmp.eq.s32.totalorder %s13, 3
      %p108 = scmp.ne.s32.totalorder %s103, %s105
      %p109 = scmp.eq.s32.totalorder %s13, 0
      %p110 = por %p108, %p109
      %p111 = scmp.ne.s32.totalorder %s103, %s105
      %p112 = scmp.eq.s32.totalorder %s18, 3
      %p113 = por %p111, %p112
      %p114 = scmp.ne.s32.totalorder %s105, %s106
      %p115 = scmp.eq.s32.totalorder %s18, 0
      %p116 = por %p114, %p115
      %p117 = scmp.ne.s32.totalorder %s105, %s106
      %p118 = scmp.eq.s32.totalorder %s19, 3
      %p119 = por %p117, %p118
      %p121 = scmp.ne.s32.totalorder %s106, %s120
      %p122 = scmp.eq.s32.totalorder %s19, 0
      %p123 = por %p121, %p122
      %s124 = ssub.s32 %s20, %s32
      %s125 = ssub.s32 %s21, %s28
      %s126 = sor.u32 %s124, %s125
      %p127 = scmp.eq.s32.totalorder %s126, 0
      %s129 = sadd.s32 %s128, 1
      %s130 = scalar_select %p127, %s128, %s129
      %p133 = pneg %p127
      %p134 = scmp.eq.s32.totalorder %s13, 3
      %p135 = por %p133, %p134
      %p136 = scmp.ne.s32.totalorder %s128, %s131
      %p137 = scmp.eq.s32.totalorder %s13, 0
      %p138 = por %p136, %p137
      %p139 = scmp.ne.s32.totalorder %s128, %s131
      %p140 = scmp.eq.s32.totalorder %s18, 3
      %p141 = por %p139, %p140
      %p142 = scmp.ne.s32.totalorder %s131, %s132
      %p143 = scmp.eq.s32.totalorder %s18, 0
      %p144 = por %p142, %p143
      %p145 = scmp.ne.s32.totalorder %s131, %s132
      %p146 = scmp.eq.s32.totalorder %s19, 3
      %p147 = por %p145, %p146
      %p149 = scmp.ne.s32.totalorder %s132, %s148
      %p150 = scmp.eq.s32.totalorder %s19, 0
      %p151 = por %p149, %p150
      %p152 = scmp.le.s32.totalorder 1, %s13
      %p153 = scmp.lt.s32.totalorder %s13, 5
      %p154 = pnand %p152, %p153
      %p155 = pneg %p154
      // Predicated region
      $region9: #{tpu_custom_call.1} parent=5 // pred_check
        _
      $region10: #{tpu_custom_call.1} parent=5 // pred_check_branch
        %157 = sbr.rel (%p154) target = $region12
      $region11: #{tpu_custom_call.1} parent=5 // pred_region
        %s158 = ssub.s32 %s13, 1
        // Predicated region
        $region13: #{tpu_custom_call.1} parent=11 // pred_check
          %p159 = pneg %p74
        $region14: #{tpu_custom_call.1} parent=11 // pred_check_branch
          %161 = sbr.rel (%p159) target = $region16
        $region15: #{tpu_custom_call.1} parent=11 // pred_region
          _
        $region16: #{tpu_custom_call.1} parent=11 // pred_fallthru
          _
        // Predicated region
        $region17: #{tpu_custom_call.1} parent=11 // pred_check
          %p162 = pneg %p95
        $region18: #{tpu_custom_call.1} parent=11 // pred_check_branch
          %164 = sbr.rel (%p162) target = $region20
        $region19: #{tpu_custom_call.1} parent=11 // pred_region
          _
        $region20: #{tpu_custom_call.1} parent=11 // pred_fallthru
          _
        // Predicated region
        $region21: #{tpu_custom_call.1} parent=11 // pred_check
          %p165 = pneg %p116
        $region22: #{tpu_custom_call.1} parent=11 // pred_check_branch
          %167 = sbr.rel (%p165) target = $region24
        $region23: #{tpu_custom_call.1} parent=11 // pred_region
          _
        $region24: #{tpu_custom_call.1} parent=11 // pred_fallthru
          _
      $region12: #{tpu_custom_call.1} parent=5 // pred_fallthru
        _
      %p168 = scmp.lt.s32.totalorder %s13, 4
      // Predicated region
      $region25: #{tpu_custom_call.1} parent=5 // pred_check
        %p169 = pneg %p168
      $region26: #{tpu_custom_call.1} parent=5 // pred_check_branch
        %171 = sbr.rel (%p169) target = $region28
      $region27: #{tpu_custom_call.1} parent=5 // pred_region
        // Predicated region
        $region29: #{tpu_custom_call.1} parent=27 // pred_check
          %p172 = pneg %p47
        $region30: #{tpu_custom_call.1} parent=27 // pred_check_branch
          %174 = sbr.rel (%p172) target = $region32
        $region31: #{tpu_custom_call.1} parent=27 // pred_region
          %p175 = scmp.lt.s32.totalorder %s20, 1
          %s176 = scalar_select %p175, %s20, 1
          %p177 = scmp.lt.s32.totalorder %s21, 1
          %s178 = scalar_select %p177, %s21, 1
          %s179 = smul.addr %s178, 30
          %s180 = smul.addr %s176, 60
          %s181 = sadd.s32 %s179, %s180
          %s182 = smul.addr %s181, 8
          %s183 = scalar_lea.vmem %s0, %s182
        $region32: #{tpu_custom_call.1} parent=27 // pred_fallthru
          _
      $region28: #{tpu_custom_call.1} parent=5 // pred_fallthru
        _
      %p184 = scmp.le.s32.totalorder 1, %s13
      %p185 = scmp.lt.s32.totalorder %s13, 5
      %p186 = pnand %p184, %p185
      %p187 = pneg %p186
      // Predicated region
      $region33: #{tpu_custom_call.1} parent=5 // pred_check
        _
      $region34: #{tpu_custom_call.1} parent=5 // pred_check_branch
        %189 = sbr.rel (%p186) target = $region36
      $region35: #{tpu_custom_call.1} parent=5 // pred_region
        %s190 = ssub.s32 %s13, 1
        %p191 = scmp.lt.s32.totalorder %s22, 1
        %s192 = scalar_select %p191, %s22, 1
        %p193 = scmp.lt.s32.totalorder %s23, 1
        %s194 = scalar_select %p193, %s23, 1
        %s195 = smul.addr %s194, 30
        %s196 = smul.addr %s192, 60
        %s197 = sadd.s32 %s195, %s196
        %s198 = smul.addr %s197, 8
        %s199 = scalar_lea.vmem %s0, %s198
        %p200 = pneg %p53
        %p201 = pneg %p50
        %p202 = pneg %p74
        %p203 = pneg %p71
        %p204 = pneg %p95
        %p205 = pneg %p92
        %p206 = pneg %p116
        %p207 = pneg %p113
        %p208 = pneg %p144
        %p209 = pneg %p141
        %s210 = sand.u32 %s131, 1
        %s211 = scalar_lea.sflag [#allocation3], %s210
        %s212 = sand.u32 %s131, 1
        %s213 = smul.addr %s212, 128
        %s214 = scalar_lea.vmem [#allocation2], %s213
        %p215 = scmp.lt.s32.totalorder %s22, 1
        %s216 = scalar_select %p215, %s22, 1
        %p217 = scmp.lt.s32.totalorder %s23, 1
        %s218 = scalar_select %p217, %s23, 1
        %s219 = smul.addr %s218, 30
        %s220 = smul.addr %s216, 60
        %s221 = sadd.s32 %s219, %s220
        %s222 = smul.addr %s221, 8
        %s223 = scalar_lea.vmem %s0, %s222
        %s224 = smul.u32 16, %s23
        %v226 = vld [vmem:[%s1] sm:$0x1]
        %v227 = vld [vmem:[%s223] sm:$0xff]
        %v228 = vld [vmem:[%s223 + $0x8] sm:$0xff]
        %v229 = vld [vmem:[%s223 + $0x18] sm:$0xff]
        %v230 = vld [vmem:[%s223 + $0x20] sm:$0xff]
        %v231 = vld [vmem:[%s223 + $0x30] sm:$0xff]
        %v232 = vld [vmem:[%s223 + $0x38] sm:$0xff]
        %v233 = vld [vmem:[%s223 + $0x48] sm:$0xff]
        %v234 = vld [vmem:[%s223 + $0x50] sm:$0xff]
        %v235 = vld [vmem:[%s223 + $0x60] sm:$0xff]
        %v236 = vld [vmem:[%s223 + $0x68] sm:$0xff]
        %v237 = vld [vmem:[%s223 + $0x78] sm:$0xff]
        %v238 = vld [vmem:[%s223 + $0x80] sm:$0xff]
        %v239 = vld [vmem:[%s223 + $0x90] sm:$0xff]
        %v240 = vld [vmem:[%s223 + $0x98] sm:$0xff]
        %v241 = vld [vmem:[%s223 + $0xa8] sm:$0xff]
        %v242 = vld [vmem:[%s223 + $0xb0] sm:$0xff]
        %v243 = vlaneseq
        %v244 = vshrl.u32 %v243, 7
        %v245 = vsub.s32 0, %v244
        %v246 = vrot.slane %v226, %v245
        %v247 = vmul.f32 %v227, %v246
        %v248 = vmul.f32 %v228, %v246
        %v249 = vmul.f32 %v229, %v246
        %v250 = vmul.f32 %v230, %v246
        %v251 = vmul.f32 %v231, %v246
        %v252 = vmul.f32 %v232, %v246
        %v253 = vmul.f32 %v233, %v246
        %v254 = vmul.f32 %v234, %v246
        %v255 = vmul.f32 %v235, %v246
        %v256 = vmul.f32 %v236, %v246
        %v257 = vmul.f32 %v237, %v246
        %v258 = vmul.f32 %v238, %v246
        %v259 = vmul.f32 %v239, %v246
        %v260 = vmul.f32 %v240, %v246
        %v261 = vmul.f32 %v241, %v246
        %v262 = vmul.f32 %v242, %v246
        %v263 = vadd.f32 %v247, 0.0
        %v264 = vadd.f32 %v248, 0.0
        %v265 = vadd.f32 %v249, 0.0
        %v266 = vadd.f32 %v250, 0.0
        %v267 = vadd.f32 %v251, 0.0
        %v268 = vadd.f32 %v252, 0.0
        %v269 = vadd.f32 %v253, 0.0
        %v270 = vadd.f32 %v254, 0.0
        %v271 = vadd.f32 %v255, 0.0
        %v272 = vadd.f32 %v256, 0.0
        %v273 = vadd.f32 %v257, 0.0
        %v274 = vadd.f32 %v258, 0.0
        %v275 = vadd.f32 %v259, 0.0
        %v276 = vadd.f32 %v260, 0.0
        %v277 = vadd.f32 %v261, 0.0
        %v278 = vadd.f32 %v262, 0.0
        %v279 = vld [vmem:[%s1 + $0x1] sm:$0x1]
        %v280 = vld [vmem:[%s223 + $0x1] sm:$0xff]
        %v281 = vld [vmem:[%s223 + $0x9] sm:$0xff]
        %v282 = vld [vmem:[%s223 + $0x19] sm:$0xff]
        %v283 = vld [vmem:[%s223 + $0x21] sm:$0xff]
        %v284 = vld [vmem:[%s223 + $0x31] sm:$0xff]
        %v285 = vld [vmem:[%s223 + $0x39] sm:$0xff]
        %v286 = vld [vmem:[%s223 + $0x49] sm:$0xff]
        %v287 = vld [vmem:[%s223 + $0x51] sm:$0xff]
        %v288 = vld [vmem:[%s223 + $0x61] sm:$0xff]
        %v289 = vld [vmem:[%s223 + $0x69] sm:$0xff]
        %v290 = vld [vmem:[%s223 + $0x79] sm:$0xff]
        %v291 = vld [vmem:[%s223 + $0x81] sm:$0xff]
        %v292 = vld [vmem:[%s223 + $0x91] sm:$0xff]
        %v293 = vld [vmem:[%s223 + $0x99] sm:$0xff]
        %v294 = vld [vmem:[%s223 + $0xa9] sm:$0xff]
        %v295 = vld [vmem:[%s223 + $0xb1] sm:$0xff]
        %v296 = vlaneseq
        %v297 = vshrl.u32 %v296, 7
        %v298 = vsub.s32 0, %v297
        %v299 = vrot.slane %v279, %v298
        %v300 = vmul.f32 %v280, %v299
        %v301 = vmul.f32 %v281, %v299
        %v302 = vmul.f32 %v282, %v299
        %v303 = vmul.f32 %v283, %v299
        %v304 = vmul.f32 %v284, %v299
        %v305 = vmul.f32 %v285, %v299
        %v306 = vmul.f32 %v286, %v299
        %v307 = vmul.f32 %v287, %v299
        %v308 = vmul.f32 %v288, %v299
        %v309 = vmul.f32 %v289, %v299
        %v310 = vmul.f32 %v290, %v299
        %v311 = vmul.f32 %v291, %v299
        %v312 = vmul.f32 %v292, %v299
        %v313 = vmul.f32 %v293, %v299
        %v314 = vmul.f32 %v294, %v299
        %v315 = vmul.f32 %v295, %v299
        %v316 = vadd.f32 %v263, %v300
        %v317 = vadd.f32 %v264, %v301
        %v318 = vadd.f32 %v265, %v302
        %v319 = vadd.f32 %v266, %v303
        %v320 = vadd.f32 %v267, %v304
        %v321 = vadd.f32 %v268, %v305
        %v322 = vadd.f32 %v269, %v306
        %v323 = vadd.f32 %v270, %v307
        %v324 = vadd.f32 %v271, %v308
        %v325 = vadd.f32 %v272, %v309
        %v326 = vadd.f32 %v273, %v310
        %v327 = vadd.f32 %v274, %v311
        %v328 = vadd.f32 %v275, %v312
        %v329 = vadd.f32 %v276, %v313
        %v330 = vadd.f32 %v277, %v314
        %v331 = vadd.f32 %v278, %v315
        %v332 = vld [vmem:[%s1 + $0x2] sm:$0x1]
        %v333 = vld [vmem:[%s223 + $0x2] sm:$0xff]
        %v334 = vld [vmem:[%s223 + $0xa] sm:$0xff]
        %v335 = vld [vmem:[%s223 + $0x1a] sm:$0xff]
        %v336 = vld [vmem:[%s223 + $0x22] sm:$0xff]
        %v337 = vld [vmem:[%s223 + $0x32] sm:$0xff]
        %v338 = vld [vmem:[%s223 + $0x3a] sm:$0xff]
        %v339 = vld [vmem:[%s223 + $0x4a] sm:$0xff]
        %v340 = vld [vmem:[%s223 + $0x52] sm:$0xff]
        %v341 = vld [vmem:[%s223 + $0x62] sm:$0xff]
        %v342 = vld [vmem:[%s223 + $0x6a] sm:$0xff]
        %v343 = vld [vmem:[%s223 + $0x7a] sm:$0xff]
        %v344 = vld [vmem:[%s223 + $0x82] sm:$0xff]
        %v345 = vld [vmem:[%s223 + $0x92] sm:$0xff]
        %v346 = vld [vmem:[%s223 + $0x9a] sm:$0xff]
        %v347 = vld [vmem:[%s223 + $0xaa] sm:$0xff]
        %v348 = vld [vmem:[%s223 + $0xb2] sm:$0xff]
        %v349 = vlaneseq
        %v350 = vshrl.u32 %v349, 7
        %v351 = vsub.s32 0, %v350
        %v352 = vrot.slane %v332, %v351
        %v353 = vmul.f32 %v333, %v352
        %v354 = vmul.f32 %v334, %v352
        %v355 = vmul.f32 %v335, %v352
        %v356 = vmul.f32 %v336, %v352
        %v357 = vmul.f32 %v337, %v352
        %v358 = vmul.f32 %v338, %v352
        %v359 = vmul.f32 %v339, %v352
        %v360 = vmul.f32 %v340, %v352
        %v361 = vmul.f32 %v341, %v352
        %v362 = vmul.f32 %v342, %v352
        %v363 = vmul.f32 %v343, %v352
        %v364 = vmul.f32 %v344, %v352
        %v365 = vmul.f32 %v345, %v352
        %v366 = vmul.f32 %v346, %v352
        %v367 = vmul.f32 %v347, %v352
        %v368 = vmul.f32 %v348, %v352
        %v369 = vadd.f32 %v316, %v353
        %v370 = vadd.f32 %v317, %v354
        %v371 = vadd.f32 %v318, %v355
        %v372 = vadd.f32 %v319, %v356
        %v373 = vadd.f32 %v320, %v357
        %v374 = vadd.f32 %v321, %v358
        %v375 = vadd.f32 %v322, %v359
        %v376 = vadd.f32 %v323, %v360
        %v377 = vadd.f32 %v324, %v361
        %v378 = vadd.f32 %v325, %v362
        %v379 = vadd.f32 %v326, %v363
        %v380 = vadd.f32 %v327, %v364
        %v381 = vadd.f32 %v328, %v365
        %v382 = vadd.f32 %v329, %v366
        %v383 = vadd.f32 %v330, %v367
        %v384 = vadd.f32 %v331, %v368
        %v385 = vld [vmem:[%s1 + $0x3] sm:$0x1]
        %s386 = scalar_lea.vmem %s223, 24
        %v387 = vld [vmem:[%s386] sm:$0xff]
        %v388 = vld [vmem:[%s386 + $0x8] sm:$0xff]
        %v389 = vld [vmem:[%s386 + $0x18] sm:$0xff]
        %v390 = vld [vmem:[%s386 + $0x20] sm:$0xff]
        %v391 = vld [vmem:[%s386 + $0x30] sm:$0xff]
        %v392 = vld [vmem:[%s386 + $0x38] sm:$0xff]
        %v393 = vld [vmem:[%s386 + $0x48] sm:$0xff]
        %v394 = vld [vmem:[%s386 + $0x50] sm:$0xff]
        %v395 = vld [vmem:[%s386 + $0x60] sm:$0xff]
        %v396 = vld [vmem:[%s386 + $0x68] sm:$0xff]
        %v397 = vld [vmem:[%s386 + $0x78] sm:$0xff]
        %v398 = vld [vmem:[%s386 + $0x80] sm:$0xff]
        %v399 = vld [vmem:[%s386 + $0x90] sm:$0xff]
        %v400 = vld [vmem:[%s386 + $0x98] sm:$0xff]
        %v401 = vld [vmem:[%s386 + $0xa8] sm:$0xff]
        %v402 = vld [vmem:[%s386 + $0xb0] sm:$0xff]
        %v403 = vlaneseq
        %v404 = vshrl.u32 %v403, 7
        %v405 = vsub.s32 0, %v404
        %v406 = vrot.slane %v385, %v405
        %v407 = vmul.f32 %v387, %v406
        %v408 = vmul.f32 %v388, %v406
        %v409 = vmul.f32 %v389, %v406
        %v410 = vmul.f32 %v390, %v406
        %v411 = vmul.f32 %v391, %v406
        %v412 = vmul.f32 %v392, %v406
        %v413 = vmul.f32 %v393, %v406
        %v414 = vmul.f32 %v394, %v406
        %v415 = vmul.f32 %v395, %v406
        %v416 = vmul.f32 %v396, %v406
        %v417 = vmul.f32 %v397, %v406
        %v418 = vmul.f32 %v398, %v406
        %v419 = vmul.f32 %v399, %v406
        %v420 = vmul.f32 %v400, %v406
        %v421 = vmul.f32 %v401, %v406
        %v422 = vmul.f32 %v402, %v406
        %v423 = vadd.f32 %v369, %v407
        %v424 = vadd.f32 %v370, %v408
        %v425 = vadd.f32 %v371, %v409
        %v426 = vadd.f32 %v372, %v410
        %v427 = vadd.f32 %v373, %v411
        %v428 = vadd.f32 %v374, %v412
        %v429 = vadd.f32 %v375, %v413
        %v430 = vadd.f32 %v376, %v414
        %v431 = vadd.f32 %v377, %v415
        %v432 = vadd.f32 %v378, %v416
        %v433 = vadd.f32 %v379, %v417
        %v434 = vadd.f32 %v380, %v418
        %v435 = vadd.f32 %v381, %v419
        %v436 = vadd.f32 %v382, %v420
        %v437 = vadd.f32 %v383, %v421
        %v438 = vadd.f32 %v384, %v422
        %v439 = vld [vmem:[%s1 + $0x4] sm:$0x1]
        %v440 = vld [vmem:[%s386 + $0x1] sm:$0xff]
        %v441 = vld [vmem:[%s386 + $0x9] sm:$0xff]
        %v442 = vld [vmem:[%s386 + $0x19] sm:$0xff]
        %v443 = vld [vmem:[%s386 + $0x21] sm:$0xff]
        %v444 = vld [vmem:[%s386 + $0x31] sm:$0xff]
        %v445 = vld [vmem:[%s386 + $0x39] sm:$0xff]
        %v446 = vld [vmem:[%s386 + $0x49] sm:$0xff]
        %v447 = vld [vmem:[%s386 + $0x51] sm:$0xff]
        %v448 = vld [vmem:[%s386 + $0x61] sm:$0xff]
        %v449 = vld [vmem:[%s386 + $0x69] sm:$0xff]
        %v450 = vld [vmem:[%s386 + $0x79] sm:$0xff]
        %v451 = vld [vmem:[%s386 + $0x81] sm:$0xff]
        %v452 = vld [vmem:[%s386 + $0x91] sm:$0xff]
        %v453 = vld [vmem:[%s386 + $0x99] sm:$0xff]
        %v454 = vld [vmem:[%s386 + $0xa9] sm:$0xff]
        %v455 = vld [vmem:[%s386 + $0xb1] sm:$0xff]
        %v456 = vlaneseq
        %v457 = vshrl.u32 %v456, 7
        %v458 = vsub.s32 0, %v457
        %v459 = vrot.slane %v439, %v458
        %v460 = vmul.f32 %v440, %v459
        %v461 = vmul.f32 %v441, %v459
        %v462 = vmul.f32 %v442, %v459
        %v463 = vmul.f32 %v443, %v459
        %v464 = vmul.f32 %v444, %v459
        %v465 = vmul.f32 %v445, %v459
        %v466 = vmul.f32 %v446, %v459
        %v467 = vmul.f32 %v447, %v459
        %v468 = vmul.f32 %v448, %v459
        %v469 = vmul.f32 %v449, %v459
        %v470 = vmul.f32 %v450, %v459
        %v471 = vmul.f32 %v451, %v459
        %v472 = vmul.f32 %v452, %v459
        %v473 = vmul.f32 %v453, %v459
        %v474 = vmul.f32 %v454, %v459
        %v475 = vmul.f32 %v455, %v459
        %v476 = vadd.f32 %v423, %v460
        %v477 = vadd.f32 %v424, %v461
        %v478 = vadd.f32 %v425, %v462
        %v479 = vadd.f32 %v426, %v463
        %v480 = vadd.f32 %v427, %v464
        %v481 = vadd.f32 %v428, %v465
        %v482 = vadd.f32 %v429, %v466
        %v483 = vadd.f32 %v430, %v467
        %v484 = vadd.f32 %v431, %v468
        %v485 = vadd.f32 %v432, %v469
        %v486 = vadd.f32 %v433, %v470
        %v487 = vadd.f32 %v434, %v471
        %v488 = vadd.f32 %v435, %v472
        %v489 = vadd.f32 %v436, %v473
        %v490 = vadd.f32 %v437, %v474
        %v491 = vadd.f32 %v438, %v475
        %v492 = vld [vmem:[%s1 + $0x5] sm:$0x1]
        %v493 = vld [vmem:[%s386 + $0x2] sm:$0xff]
        %v494 = vld [vmem:[%s386 + $0xa] sm:$0xff]
        %v495 = vld [vmem:[%s386 + $0x1a] sm:$0xff]
        %v496 = vld [vmem:[%s386 + $0x22] sm:$0xff]
        %v497 = vld [vmem:[%s386 + $0x32] sm:$0xff]
        %v498 = vld [vmem:[%s386 + $0x3a] sm:$0xff]
        %v499 = vld [vmem:[%s386 + $0x4a] sm:$0xff]
        %v500 = vld [vmem:[%s386 + $0x52] sm:$0xff]
        %v501 = vld [vmem:[%s386 + $0x62] sm:$0xff]
        %v502 = vld [vmem:[%s386 + $0x6a] sm:$0xff]
        %v503 = vld [vmem:[%s386 + $0x7a] sm:$0xff]
        %v504 = vld [vmem:[%s386 + $0x82] sm:$0xff]
        %v505 = vld [vmem:[%s386 + $0x92] sm:$0xff]
        %v506 = vld [vmem:[%s386 + $0x9a] sm:$0xff]
        %v507 = vld [vmem:[%s386 + $0xaa] sm:$0xff]
        %v508 = vld [vmem:[%s386 + $0xb2] sm:$0xff]
        %v509 = vlaneseq
        %v510 = vshrl.u32 %v509, 7
        %v511 = vsub.s32 0, %v510
        %v512 = vrot.slane %v492, %v511
        %v513 = vmul.f32 %v493, %v512
        %v514 = vmul.f32 %v494, %v512
        %v515 = vmul.f32 %v495, %v512
        %v516 = vmul.f32 %v496, %v512
        %v517 = vmul.f32 %v497, %v512
        %v518 = vmul.f32 %v498, %v512
        %v519 = vmul.f32 %v499, %v512
        %v520 = vmul.f32 %v500, %v512
        %v521 = vmul.f32 %v501, %v512
        %v522 = vmul.f32 %v502, %v512
        %v523 = vmul.f32 %v503, %v512
        %v524 = vmul.f32 %v504, %v512
        %v525 = vmul.f32 %v505, %v512
        %v526 = vmul.f32 %v506, %v512
        %v527 = vmul.f32 %v507, %v512
        %v528 = vmul.f32 %v508, %v512
        %v529 = vadd.f32 %v476, %v513
        %v530 = vadd.f32 %v477, %v514
        %v531 = vadd.f32 %v478, %v515
        %v532 = vadd.f32 %v479, %v516
        %v533 = vadd.f32 %v480, %v517
        %v534 = vadd.f32 %v481, %v518
        %v535 = vadd.f32 %v482, %v519
        %v536 = vadd.f32 %v483, %v520
        %v537 = vadd.f32 %v484, %v521
        %v538 = vadd.f32 %v485, %v522
        %v539 = vadd.f32 %v486, %v523
        %v540 = vadd.f32 %v487, %v524
        %v541 = vadd.f32 %v488, %v525
        %v542 = vadd.f32 %v489, %v526
        %v543 = vadd.f32 %v490, %v527
        %v544 = vadd.f32 %v491, %v528
        %v545 = vld [vmem:[%s1 + $0x6] sm:$0x1]
        %s546 = scalar_lea.vmem %s223, 48
        %v547 = vld [vmem:[%s546] sm:$0xff]
        %v548 = vld [vmem:[%s546 + $0x8] sm:$0xff]
        %v549 = vld [vmem:[%s546 + $0x18] sm:$0xff]
        %v550 = vld [vmem:[%s546 + $0x20] sm:$0xff]
        %v551 = vld [vmem:[%s546 + $0x30] sm:$0xff]
        %v552 = vld [vmem:[%s546 + $0x38] sm:$0xff]
        %v553 = vld [vmem:[%s546 + $0x48] sm:$0xff]
        %v554 = vld [vmem:[%s546 + $0x50] sm:$0xff]
        %v555 = vld [vmem:[%s546 + $0x60] sm:$0xff]
        %v556 = vld [vmem:[%s546 + $0x68] sm:$0xff]
        %v557 = vld [vmem:[%s546 + $0x78] sm:$0xff]
        %v558 = vld [vmem:[%s546 + $0x80] sm:$0xff]
        %v559 = vld [vmem:[%s546 + $0x90] sm:$0xff]
        %v560 = vld [vmem:[%s546 + $0x98] sm:$0xff]
        %v561 = vld [vmem:[%s546 + $0xa8] sm:$0xff]
        %v562 = vld [vmem:[%s546 + $0xb0] sm:$0xff]
        %v563 = vlaneseq
        %v564 = vshrl.u32 %v563, 7
        %v565 = vsub.s32 0, %v564
        %v566 = vrot.slane %v545, %v565
        %v567 = vmul.f32 %v547, %v566
        %v568 = vmul.f32 %v548, %v566
        %v569 = vmul.f32 %v549, %v566
        %v570 = vmul.f32 %v550, %v566
        %v571 = vmul.f32 %v551, %v566
        %v572 = vmul.f32 %v552, %v566
        %v573 = vmul.f32 %v553, %v566
        %v574 = vmul.f32 %v554, %v566
        %v575 = vmul.f32 %v555, %v566
        %v576 = vmul.f32 %v556, %v566
        %v577 = vmul.f32 %v557, %v566
        %v578 = vmul.f32 %v558, %v566
        %v579 = vmul.f32 %v559, %v566
        %v580 = vmul.f32 %v560, %v566
        %v581 = vmul.f32 %v561, %v566
        %v582 = vmul.f32 %v562, %v566
        %v583 = vadd.f32 %v529, %v567
        %v584 = vadd.f32 %v530, %v568
        %v585 = vadd.f32 %v531, %v569
        %v586 = vadd.f32 %v532, %v570
        %v587 = vadd.f32 %v533, %v571
        %v588 = vadd.f32 %v534, %v572
        %v589 = vadd.f32 %v535, %v573
        %v590 = vadd.f32 %v536, %v574
        %v591 = vadd.f32 %v537, %v575
        %v592 = vadd.f32 %v538, %v576
        %v593 = vadd.f32 %v539, %v577
        %v594 = vadd.f32 %v540, %v578
        %v595 = vadd.f32 %v541, %v579
        %v596 = vadd.f32 %v542, %v580
        %v597 = vadd.f32 %v543, %v581
        %v598 = vadd.f32 %v544, %v582
        %v599 = vld [vmem:[%s1 + $0x7] sm:$0x1]
        %v600 = vld [vmem:[%s546 + $0x1] sm:$0xff]
        %v601 = vld [vmem:[%s546 + $0x9] sm:$0xff]
        %v602 = vld [vmem:[%s546 + $0x19] sm:$0xff]
        %v603 = vld [vmem:[%s546 + $0x21] sm:$0xff]
        %v604 = vld [vmem:[%s546 + $0x31] sm:$0xff]
        %v605 = vld [vmem:[%s546 + $0x39] sm:$0xff]
        %v606 = vld [vmem:[%s546 + $0x49] sm:$0xff]
        %v607 = vld [vmem:[%s546 + $0x51] sm:$0xff]
        %v608 = vld [vmem:[%s546 + $0x61] sm:$0xff]
        %v609 = vld [vmem:[%s546 + $0x69] sm:$0xff]
        %v610 = vld [vmem:[%s546 + $0x79] sm:$0xff]
        %v611 = vld [vmem:[%s546 + $0x81] sm:$0xff]
        %v612 = vld [vmem:[%s546 + $0x91] sm:$0xff]
        %v613 = vld [vmem:[%s546 + $0x99] sm:$0xff]
        %v614 = vld [vmem:[%s546 + $0xa9] sm:$0xff]
        %v615 = vld [vmem:[%s546 + $0xb1] sm:$0xff]
        %v616 = vlaneseq
        %v617 = vshrl.u32 %v616, 7
        %v618 = vsub.s32 0, %v617
        %v619 = vrot.slane %v599, %v618
        %v620 = vmul.f32 %v600, %v619
        %v621 = vmul.f32 %v601, %v619
        %v622 = vmul.f32 %v602, %v619
        %v623 = vmul.f32 %v603, %v619
        %v624 = vmul.f32 %v604, %v619
        %v625 = vmul.f32 %v605, %v619
        %v626 = vmul.f32 %v606, %v619
        %v627 = vmul.f32 %v607, %v619
        %v628 = vmul.f32 %v608, %v619
        %v629 = vmul.f32 %v609, %v619
        %v630 = vmul.f32 %v610, %v619
        %v631 = vmul.f32 %v611, %v619
        %v632 = vmul.f32 %v612, %v619
        %v633 = vmul.f32 %v613, %v619
        %v634 = vmul.f32 %v614, %v619
        %v635 = vmul.f32 %v615, %v619
        %v636 = vadd.f32 %v583, %v620
        %v637 = vadd.f32 %v584, %v621
        %v638 = vadd.f32 %v585, %v622
        %v639 = vadd.f32 %v586, %v623
        %v640 = vadd.f32 %v587, %v624
        %v641 = vadd.f32 %v588, %v625
        %v642 = vadd.f32 %v589, %v626
        %v643 = vadd.f32 %v590, %v627
        %v644 = vadd.f32 %v591, %v628
        %v645 = vadd.f32 %v592, %v629
        %v646 = vadd.f32 %v593, %v630
        %v647 = vadd.f32 %v594, %v631
        %v648 = vadd.f32 %v595, %v632
        %v649 = vadd.f32 %v596, %v633
        %v650 = vadd.f32 %v597, %v634
        %v651 = vadd.f32 %v598, %v635
        %v652 = vld [vmem:[%s1 + $0x8] sm:$0x1]
        %v653 = vld [vmem:[%s546 + $0x2] sm:$0xff]
        %v654 = vld [vmem:[%s546 + $0xa] sm:$0xff]
        %v655 = vld [vmem:[%s546 + $0x1a] sm:$0xff]
        %v656 = vld [vmem:[%s546 + $0x22] sm:$0xff]
        %v657 = vld [vmem:[%s546 + $0x32] sm:$0xff]
        %v658 = vld [vmem:[%s546 + $0x3a] sm:$0xff]
        %v659 = vld [vmem:[%s546 + $0x4a] sm:$0xff]
        %v660 = vld [vmem:[%s546 + $0x52] sm:$0xff]
        %v661 = vld [vmem:[%s546 + $0x62] sm:$0xff]
        %v662 = vld [vmem:[%s546 + $0x6a] sm:$0xff]
        %v663 = vld [vmem:[%s546 + $0x7a] sm:$0xff]
        %v664 = vld [vmem:[%s546 + $0x82] sm:$0xff]
        %v665 = vld [vmem:[%s546 + $0x92] sm:$0xff]
        %v666 = vld [vmem:[%s546 + $0x9a] sm:$0xff]
        %v667 = vld [vmem:[%s546 + $0xaa] sm:$0xff]
        %v668 = vld [vmem:[%s546 + $0xb2] sm:$0xff]
        %v669 = vlaneseq
        %v670 = vshrl.u32 %v669, 7
        %v671 = vsub.s32 0, %v670
        %v672 = vrot.slane %v652, %v671
        %v673 = vmul.f32 %v653, %v672
        %v674 = vmul.f32 %v654, %v672
        %v675 = vmul.f32 %v655, %v672
        %v676 = vmul.f32 %v656, %v672
        %v677 = vmul.f32 %v657, %v672
        %v678 = vmul.f32 %v658, %v672
        %v679 = vmul.f32 %v659, %v672
        %v680 = vmul.f32 %v660, %v672
        %v681 = vmul.f32 %v661, %v672
        %v682 = vmul.f32 %v662, %v672
        %v683 = vmul.f32 %v663, %v672
        %v684 = vmul.f32 %v664, %v672
        %v685 = vmul.f32 %v665, %v672
        %v686 = vmul.f32 %v666, %v672
        %v687 = vmul.f32 %v667, %v672
        %v688 = vmul.f32 %v668, %v672
        %v689 = vadd.f32 %v636, %v673
        %v690 = vadd.f32 %v637, %v674
        %v691 = vadd.f32 %v638, %v675
        %v692 = vadd.f32 %v639, %v676
        %v693 = vadd.f32 %v640, %v677
        %v694 = vadd.f32 %v641, %v678
        %v695 = vadd.f32 %v642, %v679
        %v696 = vadd.f32 %v643, %v680
        %v697 = vadd.f32 %v644, %v681
        %v698 = vadd.f32 %v645, %v682
        %v699 = vadd.f32 %v646, %v683
        %v700 = vadd.f32 %v647, %v684
        %v701 = vadd.f32 %v648, %v685
        %v702 = vadd.f32 %v649, %v686
        %v703 = vadd.f32 %v650, %v687
        %v704 = vadd.f32 %v651, %v688
        %v705 = vpack.c.bf16 %v690, %v689
        %v706 = vpack.c.bf16 %v692, %v691
        %v707 = vpack.c.bf16 %v694, %v693
        %v708 = vpack.c.bf16 %v696, %v695
        %v709 = vpack.c.bf16 %v698, %v697
        %v710 = vpack.c.bf16 %v700, %v699
        %v711 = vpack.c.bf16 %v702, %v701
        %v712 = vpack.c.bf16 %v704, %v703
        %v713 = vld [vmem:[%s2] sm:$0x3]
        %v714 = vld [vmem:[%s3] sm:$0x1]
        %v716 = vlaneseq
        %v717 = vshrl.u32 %v716, 7
        %v718 = vsub.s32 0, %v717
        %v719 = vrot.slane %v714, %v718
        %vm721 = vcmask 31744
        %v723 = vsel %vm721, %v705, 0
        %v726 = vsel %vm721, %v706, 0
        %v729 = vsel %vm721, %v707, 0
        %v732 = vsel %vm721, %v708, 0
        %v735 = vsel %vm721, %v709, 0
        %v738 = vsel %vm721, %v710, 0
        %v741 = vsel %vm721, %v711, 0
        %v744 = vsel %vm721, %v712, 0
        %vm746 = vcmask 1041408
        %v748 = vsel %vm746, %v713, 0
        %750 = vmatprep.subr.bf16.mxu0 0
        %751 = vmatpush1.bf16.msra.mxu0 %v748
        %752 = vmatprep.subr.bf16.mxu0 0
        %753 = vmatpush1.bf16.msra.mxu0 0
        %754 = vmatprep.subr.bf16.mxu0 0
        %755 = vmatpush1.bf16.msra.mxu0 0
        %756 = vmatprep.subr.bf16.mxu0 0
        %757 = vmatpush1.bf16.msra.mxu0 0
        %758 = vmatprep.subr.bf16.mxu0 0
        %759 = vmatpush1.bf16.msra.mxu0 0
        %760 = vmatprep.subr.bf16.mxu0 0
        %761 = vmatpush1.bf16.msra.mxu0 0
        %762 = vmatprep.subr.bf16.mxu0 0
        %763 = vmatpush1.bf16.msra.mxu0 0
        %764 = vmatprep.subr.bf16.mxu0 0
        %765 = vmatpush1.bf16.msra.mxu0 0
        %766 = vmatprep.subr.bf16.mxu0 0
        %767 = vmatpush1.bf16.msra.mxu0 0
        %768 = vmatprep.subr.bf16.mxu0 0
        %769 = vmatpush1.bf16.msra.mxu0 0
        %770 = vmatprep.subr.bf16.mxu0 0
        %771 = vmatpush1.bf16.msra.mxu0 0
        %772 = vmatprep.subr.bf16.mxu0 0
        %773 = vmatpush1.bf16.msra.mxu0 0
        %774 = vmatprep.subr.bf16.mxu0 0
        %775 = vmatpush1.bf16.msra.mxu0 0
        %776 = vmatprep.subr.bf16.mxu0 0
        %777 = vmatpush1.bf16.msra.mxu0 0
        %778 = vmatprep.subr.bf16.mxu0 0
        %779 = vmatpush1.bf16.msra.mxu0 0
        %780 = vmatprep.subr.bf16.mxu0 0
        %781 = vmatpush1.bf16.msra.mxu0 0
        %782 = vmatprep.mubr.bf16.mxu0 0
        %783 = vmatmul.mubr.bf16.gmra.mrb[0].mxu0 %v723
        %v784 = vpop.f32.mrb[0].mxu0
        %v785 = vadd.f32 %v719, %v784
        %v786 = vpop.f32.mrb[0].mxu0
        %v787 = vpop.f32.mrb[0].mxu0
        %v788 = vadd.f32 %v719, %v787
        %v789 = vpop.f32.mrb[0].mxu0
        %790 = vmatprep.mubr.bf16.mxu0 0
        %791 = vmatmul.mubr.bf16.gmra.mrb[0].mxu0 %v726
        %v792 = vpop.f32.mrb[0].mxu0
        %v793 = vadd.f32 %v719, %v792
        %v794 = vpop.f32.mrb[0].mxu0
        %v795 = vpop.f32.mrb[0].mxu0
        %v796 = vadd.f32 %v719, %v795
        %v797 = vpop.f32.mrb[0].mxu0
        %798 = vmatprep.mubr.bf16.mxu0 0
        %799 = vmatmul.mubr.bf16.gmra.mrb[0].mxu0 %v729
        %v800 = vpop.f32.mrb[0].mxu0
        %v801 = vadd.f32 %v719, %v800
        %v802 = vpop.f32.mrb[0].mxu0
        %v803 = vpop.f32.mrb[0].mxu0
        %v804 = vadd.f32 %v719, %v803
        %v805 = vpop.f32.mrb[0].mxu0
        %806 = vmatprep.mubr.bf16.mxu0 0
        %807 = vmatmul.mubr.bf16.gmra.mrb[0].mxu0 %v732
        %v808 = vpop.f32.mrb[0].mxu0
        %v809 = vadd.f32 %v719, %v808
        %v810 = vpop.f32.mrb[0].mxu0
        %v811 = vpop.f32.mrb[0].mxu0
        %v812 = vadd.f32 %v719, %v811
        %v813 = vpop.f32.mrb[0].mxu0
        %814 = vmatprep.mubr.bf16.mxu0 0
        %815 = vmatmul.mubr.bf16.gmra.mrb[0].mxu0 %v735
        %v816 = vpop.f32.mrb[0].mxu0
        %v817 = vadd.f32 %v719, %v816
        %v818 = vpop.f32.mrb[0].mxu0
        %v819 = vpop.f32.mrb[0].mxu0
        %v820 = vadd.f32 %v719, %v819
        %v821 = vpop.f32.mrb[0].mxu0
        %822 = vmatprep.mubr.bf16.mxu0 0
        %823 = vmatmul.mubr.bf16.gmra.mrb[0].mxu0 %v738
        %v824 = vpop.f32.mrb[0].mxu0
        %v825 = vadd.f32 %v719, %v824
        %v826 = vpop.f32.mrb[0].mxu0
        %v827 = vpop.f32.mrb[0].mxu0
        %v828 = vadd.f32 %v719, %v827
        %v829 = vpop.f32.mrb[0].mxu0
        %830 = vmatprep.mubr.bf16.mxu0 0
        %831 = vmatmul.mubr.bf16.gmra.mrb[0].mxu0 %v741
        %v832 = vpop.f32.mrb[0].mxu0
        %v833 = vadd.f32 %v719, %v832
        %v834 = vpop.f32.mrb[0].mxu0
        %v835 = vpop.f32.mrb[0].mxu0
        %v836 = vadd.f32 %v719, %v835
        %v837 = vpop.f32.mrb[0].mxu0
        %838 = vmatprep.mubr.bf16.mxu0 0
        %839 = vmatmul.mubr.bf16.gmra.mrb[0].mxu0 %v744
        %v840 = vpop.f32.mrb[0].mxu0
        %v841 = vadd.f32 %v719, %v840
        %v842 = vpop.f32.mrb[0].mxu0
        %v843 = vpop.f32.mrb[0].mxu0
        %v844 = vadd.f32 %v719, %v843
        %v845 = vpop.f32.mrb[0].mxu0
        %846 = vdwg.mxu0
        %847 = vst [vmem:[%s214] sm:$0xff] %v785
        %848 = vst [vmem:[%s214 + $0x8] sm:$0xff] %v788
        %849 = vst [vmem:[%s214 + $0x10] sm:$0xff] %v793
        %850 = vst [vmem:[%s214 + $0x18] sm:$0xff] %v796
        %851 = vst [vmem:[%s214 + $0x20] sm:$0xff] %v801
        %852 = vst [vmem:[%s214 + $0x28] sm:$0xff] %v804
        %853 = vst [vmem:[%s214 + $0x30] sm:$0xff] %v809
        %854 = vst [vmem:[%s214 + $0x38] sm:$0xff] %v812
        %855 = vst [vmem:[%s214 + $0x40] sm:$0xff] %v817
        %856 = vst [vmem:[%s214 + $0x48] sm:$0xff] %v820
        %857 = vst [vmem:[%s214 + $0x50] sm:$0xff] %v825
        %858 = vst [vmem:[%s214 + $0x58] sm:$0xff] %v828
        %859 = vst [vmem:[%s214 + $0x60] sm:$0xff] %v833
        %860 = vst [vmem:[%s214 + $0x68] sm:$0xff] %v836
        %861 = vst [vmem:[%s214 + $0x70] sm:$0xff] %v841
        %862 = vst [vmem:[%s214 + $0x78] sm:$0xff] %v844
        %s863 = sand.u32 %s131, 1
        %s864 = scalar_lea.sflag [#allocation3], %s863
        %s865 = sand.u32 %s131, 1
        %s866 = smul.addr %s865, 128
        %s867 = scalar_lea.vmem [#allocation2], %s866
        // Predicated region
        $region37: #{tpu_custom_call.1} parent=35 // pred_check
          %p868 = pneg %p141
        $region38: #{tpu_custom_call.1} parent=35 // pred_check_branch
          %870 = sbr.rel (%p868) target = $region40
        $region39: #{tpu_custom_call.1} parent=35 // pred_region
          %s871 = smul.u32 16, %s23
          %s873 = ssub.s32 2048, 2048
          %874 = vsyncadd %s864, %s873
          %s875 = smul.addr %s22, 32
          %s876 = sadd.s32 %s871, %s875
          %s877 = smul.addr %s876, 128
          %s878 = scalar_lea.hbm %s4, %s877
          %s879 = sshll.u32 %s867, 4
          %s880 = int_to_ptr.vmem [resolvable:$true] %s879
          %885 = dma.vmem_to_hbm [thread:$0]  %s880, 2048, %s878, %s864, 128, 128, 8
        $region40: #{tpu_custom_call.1} parent=35 // pred_fallthru
          _
      $region36: #{tpu_custom_call.1} parent=5 // pred_fallthru
        _
      %p886 = scmp.le.s32.totalorder 2, %s13
      // Predicated region
      $region41: #{tpu_custom_call.1} parent=5 // pred_check
        %p887 = pneg %p886
      $region42: #{tpu_custom_call.1} parent=5 // pred_check_branch
        %889 = sbr.rel (%p887) target = $region44
      $region43: #{tpu_custom_call.1} parent=5 // pred_region
        %s890 = ssub.s32 %s13, 2
        // Predicated region
        $region45: #{tpu_custom_call.1} parent=43 // pred_check
          %p891 = pneg %p147
        $region46: #{tpu_custom_call.1} parent=43 // pred_check_branch
          %893 = sbr.rel (%p891) target = $region48
        $region47: #{tpu_custom_call.1} parent=43 // pred_region
          %s894 = sand.u32 %s132, 1
          %s895 = scalar_lea.sflag [#allocation3], %s894
          %s896 = sand.u32 %s132, 1
          %s897 = smul.addr %s896, 128
          %s898 = scalar_lea.vmem [#allocation2], %s897
          %899 = dma.done %s895, 2048
        $region48: #{tpu_custom_call.1} parent=43 // pred_fallthru
          _
      $region44: #{tpu_custom_call.1} parent=5 // pred_fallthru
        _
    $region6: #{tpu_custom_call.1} parent=1 // loop_footer
      %s17 = sadd.s32 1, %s13
    $region7: #{tpu_custom_call.1} parent=1 // loop_footer_branch
      %12 = sbr.rel target = $region3
    $region8: #{tpu_custom_call.1} parent=1 // loop_exit
      _
    %900 = vsyncpa [#allocation3], 1
    %s901 = scalar_lea.sflag [#allocation3], 1
    %902 = vsyncpa %s901, 1

</llo_original>
